<compile_context>
chip_gen: v7x
topology: tpu7x:2x2x1
jax: 0.10.0
libtpu: 0.0.40
codegen_flags: <defaults>
</compile_context>

<pallas_src>
import jax
import jax.numpy as jnp
from jax.experimental import pallas as pl
from jax.experimental.pallas import tpu as pltpu

CIN = 14
COUT = 336


def _conv1x1_kernel(x_ref, w_ref, o_ref):
    # x_ref: (CIN, 1)        -- input channel column
    # w_ref: (CIN+1, COUT)   -- rows 0..CIN-1: W^T ; row CIN: bias
    # o_ref: (1, COUT)
    w = w_ref[0:CIN, :]                 # static ref view (zero runtime cost)
    b = w_ref[CIN:CIN + 1, :]           # bias row
    prod = x_ref[...] * w               # VPU broadcast-multiply -> (CIN, COUT)
    acc = jnp.sum(prod, axis=0, keepdims=True)   # XLU sublane reduce -> (1, COUT)
    o_ref[...] = (acc + b).astype(o_ref.dtype)


def prepare_params(weight, bias):
    """One-time layout: (Cout,Cin,1,1), (Cout,) -> (Cin+1, Cout) f32, bias folded in."""
    cout, cin = weight.shape[0], weight.shape[1]
    w_mat = weight.reshape(cout, cin).astype(jnp.float32).T      # (Cin, Cout)
    b_row = bias.astype(jnp.float32).reshape(1, cout)            # (1,  Cout)
    return jnp.concatenate([w_mat, b_row], axis=0)               # (Cin+1, Cout)


def conv2d_1x1(x_nchw, w_aug):
    """1x1 conv, stride 1, specialized for the module's N*H*W == 1 workload.

    x_nchw: (N, Cin, H, W) float32 with N*H*W == 1
    w_aug:  (Cin+1, Cout) float32   (prepared once by prepare_params)
    returns (N, Cout, H, W) float32
    """
    N, Cin, H, W = x_nchw.shape
    assert N * H * W == 1, "module spec is [1, 14, 1, 1]; tile over M if this grows"
    assert Cin == CIN
    cout = w_aug.shape[1]

    # Pure reshape (no transpose needed since N = H = W = 1).
    x_col = x_nchw.reshape(Cin, 1)

    out = pl.pallas_call(
        _conv1x1_kernel,
        out_shape=jax.ShapeDtypeStruct((1, cout), jnp.float32),
        in_specs=[
            pl.BlockSpec(memory_space=pltpu.MemorySpace.VMEM),
            pl.BlockSpec(memory_space=pltpu.MemorySpace.VMEM),
        ],
        out_specs=pl.BlockSpec(memory_space=pltpu.MemorySpace.VMEM),
        cost_estimate=pl.CostEstimate(
            flops=2 * Cin * cout,
            transcendentals=0,
            bytes_accessed=(Cin * 1 + (Cin + 1) * cout + cout) * 4,
        ),
    )(x_col, w_aug)

    # Trivial (no-copy) reshape back to NCHW; no lane slicing needed.
    return out.reshape(N, cout, H, W)


if __name__ == "__main__":
    key = jax.random.PRNGKey(0)
    kx, kw, kb = jax.random.split(key, 3)

    N, H, W = 1, 1, 1

    # Input like torch.randn([1, 14, 1, 1])
    x = jax.random.normal(kx, (N, CIN, H, W), dtype=jnp.float32)

    # PyTorch Conv2d default init: U(-k, k), k = 1/sqrt(fan_in), fan_in = Cin*1*1
    fan_in = CIN * 1 * 1
    bound = 1.0 / jnp.sqrt(jnp.float32(fan_in))
    weight = jax.random.uniform(kw, (COUT, CIN, 1, 1), jnp.float32,
                                minval=-bound, maxval=bound)
    bias = jax.random.uniform(kb, (COUT,), jnp.float32,
                              minval=-bound, maxval=bound)

    # One-time parameter layout (outside the per-call path).
    w_aug = prepare_params(weight, bias)

    fwd = jax.jit(lambda xv: conv2d_1x1(xv, w_aug))
    y = jax.block_until_ready(fwd(x))

    # Reference check (plain JAX) to ensure semantics match the 1x1 conv.
    ref = jnp.einsum("nchw,oc->nohw", x, weight.reshape(COUT, CIN)) \
        + bias.reshape(1, COUT, 1, 1)
    assert y.shape == (N, COUT, H, W)
    assert jnp.allclose(y, ref, atol=1e-5, rtol=1e-5)

    print("KERNEL_OK")
</pallas_src>

<mosaic_0001>
module attributes {stable_mosaic.version = 11 : i64} {
  func.func @_conv1x1_kernel(%arg0: memref<14x1xf32, #tpu.memory_space<vmem>>, %arg1: memref<15x336xf32, #tpu.memory_space<vmem>>, %arg2: memref<1x336xf32, #tpu.memory_space<vmem>>) attributes {dimension_semantics = [], scalar_prefetch = 0 : i64, scratch_operands = 0 : i64, tpu.core_type = #tpu.core_type<tc>} {
    %c0 = arith.constant 0 : index
    %c0_0 = arith.constant 0 : index
    %0 = vector.load %arg1[%c0, %c0_0] : memref<15x336xf32, #tpu.memory_space<vmem>>, vector<14x336xf32>
    %c14 = arith.constant 14 : index
    %c0_1 = arith.constant 0 : index
    %1 = vector.load %arg1[%c14, %c0_1] : memref<15x336xf32, #tpu.memory_space<vmem>>, vector<1x336xf32>
    %c0_2 = arith.constant 0 : index
    %c0_3 = arith.constant 0 : index
    %2 = vector.load %arg0[%c0_2, %c0_3] : memref<14x1xf32, #tpu.memory_space<vmem>>, vector<14x1xf32>
    %3 = vector.broadcast %2 : vector<14x1xf32> to vector<14x336xf32>
    %4 = arith.mulf %3, %0 : vector<14x336xf32>
    %cst = arith.constant dense<0.000000e+00> : vector<336xf32>
    %5 = vector.multi_reduction <add>, %4, %cst [0] : vector<14x336xf32> to vector<336xf32>
    %6 = vector.shape_cast %5 : vector<336xf32> to vector<1x336xf32>
    %7 = arith.addf %6, %1 : vector<1x336xf32>
    %c0_4 = arith.constant 0 : index
    %c0_5 = arith.constant 0 : index
    %8 = vector.load %arg2[%c0_4, %c0_5] : memref<1x336xf32, #tpu.memory_space<vmem>>, vector<1x336xf32>
    tpu.vector_store %arg2[%c0_4, %c0_5], %7 {strides = array<i32>} : memref<1x336xf32, #tpu.memory_space<vmem>>, vector<1x336xf32>,
    return
  }
}

</mosaic_0001>

<llo_original>
// kernel: _lambda_.1
$region0: #{_lambda_.1}
  #allocation0 [shape = 'u32[]', space=smem, size = 0x4, offset = 0x4, fixed_abs, tag = 'smem constant byte address 0x4 - core index']
  #allocation1 [shape = 'u32[144,128]{1,0:T(1,128)}', space=vmem, size = 0x12000, scoped, tag = 'internal scratch']
  %s0 = inlined_call_operand.vmem [shape: f32[14,1], index: 0, kind: input, shape index: {}]
  %s1 = inlined_call_operand.hbm [shape: f32[15,336], index: 1, kind: input, shape index: {}]
  %s2 = inlined_call_operand.hbm [shape: f32[1,336], index: 2, kind: output, shape index: {}]
  %s3 = sld [smem:[#allocation0]]
  $region22: #{_lambda_.1} parent=0
    _
  %s5 = ssub.s32 1, %s3
  %s6 = scalar_select 0, %s5, %s3
  $region1: #{_lambda_.1} parent=0
    #allocation2 [shape = 'u8[24576]{0}', space=vmem, size = 0x6000, scoped, tag = 'input window, operand 1, single buffered']
    #allocation3 [shape = 's32[1]{0}', space=sflag, size = 0x4, scoped, tag = 'scoped memory for _lambda_.1']
    #allocation4 [shape = 's32[1]{0}', space=sflag, size = 0x4, scoped, tag = 'scoped memory for _lambda_.1']
    #allocation5 [shape = 'u8[1536]{0}', space=vmem, size = 0x800, scoped, tag = 'output window, operand 0, single buffered']
    %7 = vsyncpa [#allocation3], 0
    %8 = vsyncpa [#allocation4], 0
    // Predicated region
    $region2: #{_lambda_.1} parent=1 // pred_check
      _
    $region3: #{_lambda_.1} parent=1 // pred_check_branch
      %10 = sbr.rel (0) target = $region5
    $region4: #{_lambda_.1} parent=1 // pred_region
      _
    $region5: #{_lambda_.1} parent=1 // pred_fallthru
      _
    // Predicated region
    $region6: #{_lambda_.1} parent=1 // pred_check
      _
    $region7: #{_lambda_.1} parent=1 // pred_check_branch
      %12 = sbr.rel (0) target = $region9
    $region8: #{_lambda_.1} parent=1 // pred_region
      %s14 = ssub.s32 768, 768
      %15 = vsyncadd [#allocation3], %s14
      %s16 = sshll.u32 [#allocation2], 4
      %s17 = int_to_ptr.vmem [resolvable:$true] %s16
      %22 = dma.hbm_to_vmem [thread:$0]  %s1, 768, %s17, [#allocation3], 384, 384, 24
    $region9: #{_lambda_.1} parent=1 // pred_fallthru
      _
    // Predicated region
    $region10: #{_lambda_.1} parent=1 // pred_check
      _
    $region11: #{_lambda_.1} parent=1 // pred_check_branch
      %24 = sbr.rel (0) target = $region13
    $region12: #{_lambda_.1} parent=1 // pred_region
      %25 = dma.done [#allocation3], 768
    $region13: #{_lambda_.1} parent=1 // pred_fallthru
      _
    %v26 = vld [vmem:[#allocation2] sm:$0xff]
    %v27 = vld [vmem:[#allocation2 + $0x8] sm:$0xff]
    %v28 = vld [vmem:[#allocation2 + $0x10] sm:$0xff]
    %v29 = vld [vmem:[#allocation2 + $0x18] sm:$0x3f]
    %v30 = vld [vmem:[#allocation2 + $0x20] sm:$0x3f]
    %v31 = vld [vmem:[#allocation2 + $0x28] sm:$0x3f]
    %s32 = scalar_lea.vmem [#allocation2], 30
    %v33 = vld [vmem:[%s32] ss:$8 sm:$0x7]
    %v34 = vld [vmem:[%s0] sm:$0xff]
    %v35 = vld [vmem:[%s0 + $0x8] sm:$0x3f]
    %37 = vset.pattern.permute.xlu0 0
    %38 = vperm.xlu0 %37, %v34
    %v39 = vpop.permute.xlu0 %38
    %42 = vset.pattern.permute.xlu0 0
    %43 = vperm.xlu0 %42, %v35
    %v44 = vpop.permute.xlu0 %43
    %v46 = vmul.f32 %v39, %v26
    %v47 = vmul.f32 %v39, %v27
    %v48 = vmul.f32 %v39, %v28
    %v49 = vmul.f32 %v44, %v29
    %v50 = vmul.f32 %v44, %v30
    %v51 = vmul.f32 %v44, %v31
    %vm52 = vcmask 1045504
    %v53 = vsel %vm52, %v49, 0.0
    %v54 = vadd.f32 %v46, %v53
    %v55 = vrot.slane %v54, 4
    %v56 = vadd.f32 %v54, %v55
    %v57 = vrot.slane %v56, 2
    %v58 = vadd.f32 %v56, %v57
    %v59 = vrot.slane %v58, 1
    %v60 = vadd.f32 %v58, %v59
    %v61 = vsel %vm52, %v50, 0.0
    %v62 = vadd.f32 %v47, %v61
    %v63 = vrot.slane %v62, 4
    %v64 = vadd.f32 %v62, %v63
    %v65 = vrot.slane %v64, 2
    %v66 = vadd.f32 %v64, %v65
    %v67 = vrot.slane %v66, 1
    %v68 = vadd.f32 %v66, %v67
    %vm69 = vcmask 654336
    %v70 = vsel %vm69, %v48, 0.0
    %vm71 = vcmask 652288
    %v72 = vsel %vm71, %v51, 0.0
    %v73 = vadd.f32 %v70, %v72
    %v74 = vrot.slane %v73, 4
    %v75 = vadd.f32 %v73, %v74
    %v76 = vrot.slane %v75, 2
    %v77 = vadd.f32 %v75, %v76
    %v78 = vrot.slane %v77, 1
    %v79 = vadd.f32 %v77, %v78
    %v81 = vlaneseq
    %v82 = vshrl.u32 %v81, 7
    %v83 = vsub.s32 0, %v82
    %v84 = vrot.slane %v33, %v83
    %v85 = vlaneseq
    %v86 = vshrl.u32 %v85, 7
    %v87 = vsub.s32 1, %v86
    %v88 = vrot.slane %v33, %v87
    %v89 = vlaneseq
    %v90 = vshrl.u32 %v89, 7
    %v91 = vsub.s32 2, %v90
    %v92 = vrot.slane %v33, %v91
    %v96 = vadd.f32 %v60, %v84
    %v97 = vadd.f32 %v68, %v88
    %v98 = vadd.f32 %v79, %v92
    %v102 = vcombine.low %v96, %v97
    %v104 = vunpack.c.l.s4 1966171168
    %v105 = vunpack.c.0.s8 %v104
    %v106 = vlaneseq
    %v107 = vshrl.u32 %v106, 7
    %v108 = vsub.s32 %v105, %v107
    %v109 = vrot.slane %v102, %v108
    %v111 = vunpack.c.l.s4 1966171168
    %v112 = vunpack.c.0.s8 %v111
    %v113 = vlaneseq
    %v114 = vshrl.u32 %v113, 7
    %v115 = vsub.s32 %v112, %v114
    %v116 = vrot.slane %v98, %v115
    %v117 = vcombine.low %v109, %v116
    %v119 = vunpack.c.l.s4 1966171168
    %v120 = vunpack.c.0.s8 %v119
    %v121 = vlaneseq
    %v122 = vshrl.u32 %v121, 7
    %v123 = vsub.s32 %v120, %v122
    %v124 = vrot.slane %v117, %v123
    %v126 = vlaneseq
    %vm127 = vcmp.ge.s32.totalorder %v126, 0
    %vm128 = vcmp.lt.s32.totalorder %v126, 336
    %vm129 = vmand %vm127, %vm128
    %130 = vst.msk [vmem:[#allocation5] sm:$0x7] %vm129, %v124
    // Predicated region
    $region14: #{_lambda_.1} parent=1 // pred_check
      _
    $region15: #{_lambda_.1} parent=1 // pred_check_branch
      %132 = sbr.rel (0) target = $region17
    $region16: #{_lambda_.1} parent=1 // pred_region
      %s134 = ssub.s32 48, 48
      %135 = vsyncadd [#allocation4], %s134
      %s137 = sshll.u32 [#allocation5], 4
      %s138 = int_to_ptr.vmem [resolvable:$true] %s137
      %140 = dma.vmem_to_hbm [thread:$0]  %s138, 48, %s2, [#allocation4]
    $region17: #{_lambda_.1} parent=1 // pred_fallthru
      _
    // Predicated region
    $region18: #{_lambda_.1} parent=1 // pred_check
      _
    $region19: #{_lambda_.1} parent=1 // pred_check_branch
      %142 = sbr.rel (0) target = $region21
    $region20: #{_lambda_.1} parent=1 // pred_region
      %143 = dma.done [#allocation4], 48
    $region21: #{_lambda_.1} parent=1 // pred_fallthru
      _
    %144 = vsyncpa [#allocation3], 1
    %145 = vsyncpa [#allocation4], 1

</llo_original>
